<compile_context>
chip_gen: v5e
topology: v5e:2x2
jax: 0.10.0
libtpu: 0.0.40
codegen_flags: <defaults>
</compile_context>

<pallas_src>
import jax
import jax.numpy as jnp
from jax.experimental import pallas as pl
from jax.experimental.pallas import tpu as pltpu


# ---------------------------------------------------------------------------
# Kernels
# ---------------------------------------------------------------------------

def _fused_kernel(x_ref, w1_ref, b1_ref, w2_ref, b2_ref, o_ref):
    """Fast path: whole 4H dimension in one shot (weights resident in VMEM)."""
    x = x_ref[...].astype(w1_ref.dtype)                       # in-kernel cast
    h = jnp.dot(x, w1_ref[...], preferred_element_type=jnp.float32)
    h = jnp.maximum(h + b1_ref[...], 0.0)                     # bias + ReLU, f32
    out = jnp.dot(h.astype(w2_ref.dtype), w2_ref[...],
                  preferred_element_type=jnp.float32)
    o_ref[...] = (out + b2_ref[...]).astype(o_ref.dtype)


def _chunked_kernel(x_ref, w1_ref, b1_ref, w2_ref, b2_ref, o_ref, acc_ref):
    """Chunked path: stream 4H in tn-wide chunks, accumulate in f32 VMEM."""
    n = pl.program_id(1)  # reduction (4H-chunk) index, last grid axis

    @pl.when(n == 0)
    def _init():
        acc_ref[...] = jnp.zeros_like(acc_ref)

    x = x_ref[...].astype(w1_ref.dtype)
    h = jnp.dot(x, w1_ref[...], preferred_element_type=jnp.float32)
    h = jnp.maximum(h + b1_ref[...], 0.0)
    acc_ref[...] += jnp.dot(h.astype(w2_ref.dtype), w2_ref[...],
                            preferred_element_type=jnp.float32)

    @pl.when(n == pl.num_programs(1) - 1)
    def _finalize():
        o_ref[...] = (acc_ref[...] + b2_ref[...]).astype(o_ref.dtype)


# ---------------------------------------------------------------------------
# Tiling / VMEM helpers
# ---------------------------------------------------------------------------

def _pick_tile(dim, cap, aligns):
    """Largest tile <= cap that divides `dim`, preferring the largest alignment
    that divides `dim`; falls back to the full dim (always a legal block)."""
    cap = max(min(cap, dim), 1)
    for align in aligns:
        if dim % align:
            continue
        t = (cap // align) * align
        while t >= align:
            if dim % t == 0:
                return t
            t -= align
    return dim


def _vmem_capacity_bytes():
    try:
        return int(pltpu.get_tpu_info().vmem_capacity_bytes)
    except Exception:
        return 64 << 20  # conservative: v7x per-TC; v5e/v6e have 128 MiB


# ---------------------------------------------------------------------------
# Parameter prep (one-time, outside the hot path)
# ---------------------------------------------------------------------------

def prepare_params(w1, b1, w2, b2, *, compute_dtype=jnp.bfloat16):
    """PyTorch nn.Linear layout in: w1 [4H, H], b1 [4H], w2 [H, 4H], b2 [H].
    Stores weights in [in, out] layout, cast once to the MXU compute dtype;
    biases stay f32 for the VPU."""
    return dict(
        w1_t=jnp.asarray(w1.T, dtype=compute_dtype),            # [H, 4H]
        b1=jnp.asarray(b1, dtype=jnp.float32).reshape(1, -1),   # [1, 4H]
        w2_t=jnp.asarray(w2.T, dtype=compute_dtype),            # [4H, H]
        b2=jnp.asarray(b2, dtype=jnp.float32).reshape(1, -1),   # [1, H]
    )


# ---------------------------------------------------------------------------
# Wrapper
# ---------------------------------------------------------------------------

def residual_block(x, params, *, tm_cap=1024, tn_cap=1024, out_dtype=None,
                   allow_fast_path=True):
    """x: [B, H]; params from prepare_params(). Returns [B, H] in out_dtype
    (default x.dtype).  Semantics: Linear(H,4H) -> ReLU -> Linear(4H,H)."""
    w1_t, b1, w2_t, b2 = params["w1_t"], params["b1"], params["w2_t"], params["b2"]
    B, H = x.shape
    H4 = w1_t.shape[1]
    assert w1_t.shape == (H, H4) and w2_t.shape == (H4, H)
    assert b1.shape == (1, H4) and b2.shape == (1, H)

    out_dtype = x.dtype if out_dtype is None else out_dtype
    x_b = jnp.dtype(x.dtype).itemsize
    w_b = jnp.dtype(w1_t.dtype).itemsize
    o_b = jnp.dtype(out_dtype).itemsize

    # Generation-aware VMEM budget (128 MiB v5e/v6e, 64 MiB v7x) with headroom.
    vmem_cap = _vmem_capacity_bytes()
    vmem_budget = max(vmem_cap - (8 << 20), 24 << 20)

    def working_set(tm, tn):
        # Double-buffered pipelined blocks + f32 accumulator (chunked only).
        pipelined = (tm * H * x_b       # x tile
                     + H * tn * w_b     # W1^T chunk
                     + tn * 4           # b1 chunk
                     + tn * H * w_b     # W2^T chunk
                     + H * 4            # b2
                     + tm * H * o_b)    # out tile
        scratch = tm * H * 4 if tn < H4 else 0
        return 2 * pipelined + scratch + (2 << 20)

    # Batch tile: as large as possible (arithmetic intensity on the streamed
    # weights = tm flops/byte), 128/256-aligned when B allows, but keep at
    # least 2 batch tiles for megacore once B is large enough.
    tm_cap_eff = min(tm_cap, max(B // 2, 256))
    tm = _pick_tile(B, tm_cap_eff, (256, 128, 16, 8))

    # 4H tile: fast path (whole 4H resident) if it fits the VMEM budget,
    # otherwise a lane-aligned chunk; shrink tn before tm on overflow.
    if allow_fast_path and working_set(tm, H4) <= vmem_budget:
        tn = H4
    else:
        tn = _pick_tile(H4, tn_cap, (512, 256, 128))
        while working_set(tm, tn) > vmem_budget:
            if tn > 128 and H4 % 128 == 0:
                new_tn = _pick_tile(H4, tn // 2, (128,))
                if new_tn < tn:
                    tn = new_tn
                    continue
            new_tm = _pick_tile(B, tm // 2, (128, 16, 8))
            if new_tm < tm:
                tm = new_tm
                continue
            break  # cannot shrink further; let the compiler have the last word

    fast = (tn == H4)
    grid_m = B // tm
    vmem_limit = int(min(vmem_cap,
                         max(working_set(tm, tn) + (4 << 20), 32 << 20)))

    # Cost hint: weights are re-streamed once per batch tile.
    flops = 4 * B * H * H4
    bytes_accessed = (B * H * x_b
                      + grid_m * (2 * H * H4 * w_b)   # W1 + W2 re-stream
                      + grid_m * H4 * 4 + H * 4       # biases
                      + B * H * o_b)
    cost = pl.CostEstimate(flops=flops, transcendentals=0,
                           bytes_accessed=bytes_accessed)

    if fast:
        grid_spec = pltpu.PrefetchScalarGridSpec(
            num_scalar_prefetch=0,
            grid=(grid_m,),
            in_specs=[
                pl.BlockSpec((tm, H), lambda m: (m, 0)),    # x tile (streams)
                pl.BlockSpec((H, H4), lambda m: (0, 0)),    # W1^T (resident)
                pl.BlockSpec((1, H4), lambda m: (0, 0)),    # b1   (resident)
                pl.BlockSpec((H4, H), lambda m: (0, 0)),    # W2^T (resident)
                pl.BlockSpec((1, H), lambda m: (0, 0)),     # b2   (resident)
            ],
            out_specs=pl.BlockSpec((tm, H), lambda m: (m, 0)),
        )
        kernel = _fused_kernel
        dims = ("parallel",)
    else:
        grid_spec = pltpu.PrefetchScalarGridSpec(
            num_scalar_prefetch=0,
            grid=(grid_m, H4 // tn),
            in_specs=[
                pl.BlockSpec((tm, H), lambda m, n: (m, 0)),  # x (resident in n)
                pl.BlockSpec((H, tn), lambda m, n: (0, n)),  # W1^T column chunk
                pl.BlockSpec((1, tn), lambda m, n: (0, n)),  # b1 chunk
                pl.BlockSpec((tn, H), lambda m, n: (n, 0)),  # W2^T row chunk
                pl.BlockSpec((1, H), lambda m, n: (0, 0)),   # b2 (resident)
            ],
            out_specs=pl.BlockSpec((tm, H), lambda m, n: (m, 0)),
            scratch_shapes=[pltpu.VMEM((tm, H), jnp.float32)],  # f32 accumulator
        )
        kernel = _chunked_kernel
        dims = ("parallel", "arbitrary")

    return pl.pallas_call(
        kernel,
        out_shape=jax.ShapeDtypeStruct((B, H), out_dtype),
        grid_spec=grid_spec,
        compiler_params=pltpu.CompilerParams(
            dimension_semantics=dims,
            vmem_limit_bytes=vmem_limit,
        ),
        cost_estimate=cost,
    )(x, w1_t, b1, w2_t, b2)


# ---------------------------------------------------------------------------
# Demo / correctness check
# ---------------------------------------------------------------------------

if __name__ == "__main__":
    B, H = 16, 64
    H4 = 4 * H
    key = jax.random.PRNGKey(0)
    kx, k1, k2, k3, k4 = jax.random.split(key, 5)

    x = jax.random.normal(kx, (B, H), dtype=jnp.float32)
    # nn.Linear layout: weight [out, in], bias [out].
    w1 = jax.random.normal(k1, (H4, H), dtype=jnp.float32) * 0.05
    b1 = jax.random.normal(k2, (H4,), dtype=jnp.float32) * 0.05
    w2 = jax.random.normal(k3, (H, H4), dtype=jnp.float32) * 0.05
    b2 = jax.random.normal(k4, (H,), dtype=jnp.float32) * 0.05

    params = prepare_params(w1, b1, w2, b2)
    ref = jnp.maximum(x @ w1.T + b1, 0.0) @ w2.T + b2

    # 1) Fast path: whole 4H resident, 1-D grid over batch tiles.
    out_fast = jax.block_until_ready(residual_block(x, params))
    # 2) Chunked path forced with tiny caps so the demo exercises the 2-D grid
    #    (2 batch tiles x 2 hidden chunks) and the f32 accumulator.
    out_chunk = jax.block_until_ready(
        residual_block(x, params, tm_cap=8, tn_cap=128, allow_fast_path=False))

    for name, out in (("fast", out_fast), ("chunked", out_chunk)):
        assert out.shape == (B, H), (name, out.shape)
        err = float(jnp.max(jnp.abs(out.astype(jnp.float32) - ref)))
        # bf16 matmul operands -> relaxed tolerance vs the f32 reference.
        assert jnp.allclose(out.astype(jnp.float32), ref,
                            atol=5e-2, rtol=5e-2), f"{name}: max abs err = {err}"

    print("KERNEL_OK")
</pallas_src>

<mosaic_0001>
module attributes {stable_mosaic.version = 11 : i64} {
  func.func @_fused_kernel(%arg0: i32, %arg1: memref<16x64xf32, #tpu.memory_space<vmem>>, %arg2: memref<64x256xbf16, #tpu.memory_space<vmem>>, %arg3: memref<1x256xf32, #tpu.memory_space<vmem>>, %arg4: memref<256x64xbf16, #tpu.memory_space<vmem>>, %arg5: memref<1x64xf32, #tpu.memory_space<vmem>>, %arg6: memref<16x64xf32, #tpu.memory_space<vmem>>) attributes {dimension_semantics = [#tpu.dimension_semantics<parallel>], iteration_bounds = array<i64: 1>, scalar_prefetch = 0 : i64, scratch_operands = 0 : i64, tpu.core_type = #tpu.core_type<tc>, window_params = [{transform_indices = @transform_0, window_bounds = array<i64: 16, 64>}, {pipeline_mode = #tpu.pipeline_mode<synchronous>, transform_indices = @transform_1, window_bounds = array<i64: 64, 256>}, {pipeline_mode = #tpu.pipeline_mode<synchronous>, transform_indices = @transform_2, window_bounds = array<i64: 1, 256>}, {pipeline_mode = #tpu.pipeline_mode<synchronous>, transform_indices = @transform_3, window_bounds = array<i64: 256, 64>}, {pipeline_mode = #tpu.pipeline_mode<synchronous>, transform_indices = @transform_4, window_bounds = array<i64: 1, 64>}, {transform_indices = @transform_5, window_bounds = array<i64: 16, 64>}]} {
    %c0 = arith.constant 0 : index
    %c0_0 = arith.constant 0 : index
    %0 = vector.load %arg1[%c0, %c0_0] : memref<16x64xf32, #tpu.memory_space<vmem>>, vector<16x64xf32>
    %1 = arith.truncf %0 : vector<16x64xf32> to vector<16x64xbf16>
    %c0_1 = arith.constant 0 : index
    %c0_2 = arith.constant 0 : index
    %2 = vector.load %arg2[%c0_1, %c0_2] : memref<64x256xbf16, #tpu.memory_space<vmem>>, vector<64x256xbf16>
    %cst = arith.constant dense<0.000000e+00> : vector<16x256xf32>
    %3 = tpu.matmul %1, %2, %cst {dimension_numbers = #tpu.dot_dimension_numbers<[1], [0], [0], [1], [0, 0, 1, 1], [], []>} : vector<16x64xbf16>, vector<64x256xbf16>, vector<16x256xf32> -> vector<16x256xf32>
    %c0_3 = arith.constant 0 : index
    %c0_4 = arith.constant 0 : index
    %4 = vector.load %arg3[%c0_3, %c0_4] : memref<1x256xf32, #tpu.memory_space<vmem>>, vector<1x256xf32>
    %5 = vector.broadcast %4 : vector<1x256xf32> to vector<16x256xf32>
    %6 = arith.addf %3, %5 : vector<16x256xf32>
    %cst_5 = arith.constant 0.000000e+00 : f32
    %7 = vector.broadcast %cst_5 : f32 to vector<16x256xf32>
    %8 = arith.maximumf %6, %7 : vector<16x256xf32>
    %9 = arith.truncf %8 : vector<16x256xf32> to vector<16x256xbf16>
    %c0_6 = arith.constant 0 : index
    %c0_7 = arith.constant 0 : index
    %10 = vector.load %arg4[%c0_6, %c0_7] : memref<256x64xbf16, #tpu.memory_space<vmem>>, vector<256x64xbf16>
    %cst_8 = arith.constant dense<0.000000e+00> : vector<16x64xf32>
    %11 = tpu.matmul %9, %10, %cst_8 {dimension_numbers = #tpu.dot_dimension_numbers<[1], [0], [0], [1], [0, 0, 1, 1], [], []>} : vector<16x256xbf16>, vector<256x64xbf16>, vector<16x64xf32> -> vector<16x64xf32>
    %c0_9 = arith.constant 0 : index
    %c0_10 = arith.constant 0 : index
    %12 = vector.load %arg5[%c0_9, %c0_10] : memref<1x64xf32, #tpu.memory_space<vmem>>, vector<1x64xf32>
    %13 = vector.broadcast %12 : vector<1x64xf32> to vector<16x64xf32>
    %14 = arith.addf %11, %13 : vector<16x64xf32>
    %c0_11 = arith.constant 0 : index
    %c0_12 = arith.constant 0 : index
    %15 = vector.load %arg6[%c0_11, %c0_12] : memref<16x64xf32, #tpu.memory_space<vmem>>, vector<16x64xf32>
    tpu.vector_store %arg6[%c0_11, %c0_12], %14 {strides = array<i32>} : memref<16x64xf32, #tpu.memory_space<vmem>>, vector<16x64xf32>,
    return
  }
  func.func @transform_0(%arg0: i32) -> (i32, i32) {
    %c0_i32 = arith.constant 0 : i32
    %c0_i32_0 = arith.constant 0 : i32
    return %arg0, %c0_i32 : i32, i32
  }
  func.func @transform_1(%arg0: i32) -> (i32, i32) {
    %c0_i32 = arith.constant 0 : i32
    %c0_i32_0 = arith.constant 0 : i32
    %c0_i32_1 = arith.constant 0 : i32
    return %c0_i32, %c0_i32_0 : i32, i32
  }
  func.func @transform_2(%arg0: i32) -> (i32, i32) {
    %c0_i32 = arith.constant 0 : i32
    %c0_i32_0 = arith.constant 0 : i32
    %c0_i32_1 = arith.constant 0 : i32
    return %c0_i32, %c0_i32_0 : i32, i32
  }
  func.func @transform_3(%arg0: i32) -> (i32, i32) {
    %c0_i32 = arith.constant 0 : i32
    %c0_i32_0 = arith.constant 0 : i32
    %c0_i32_1 = arith.constant 0 : i32
    return %c0_i32, %c0_i32_0 : i32, i32
  }
  func.func @transform_4(%arg0: i32) -> (i32, i32) {
    %c0_i32 = arith.constant 0 : i32
    %c0_i32_0 = arith.constant 0 : i32
    %c0_i32_1 = arith.constant 0 : i32
    return %c0_i32, %c0_i32_0 : i32, i32
  }
  func.func @transform_5(%arg0: i32) -> (i32, i32) {
    %c0_i32 = arith.constant 0 : i32
    %c0_i32_0 = arith.constant 0 : i32
    return %arg0, %c0_i32 : i32, i32
  }
}

</mosaic_0001>

<llo_original>
// kernel: tpu_custom_call.1
$region0: #{tpu_custom_call.1}
  #allocation0 [shape = 'u32[]', space=smem, size = 0x4, offset = 0x4, fixed_abs, tag = 'smem constant byte address 0x4 - core index']
  #allocation1 [shape = 'u32[72,128]{1,0:T(1,128)}', space=vmem, size = 0x9000, scoped, tag = 'internal scratch']
  %s0 = inlined_call_operand.vmem [shape: f32[16,64], index: 0, kind: input, shape index: {}]
  %s1 = inlined_call_operand.vmem [shape: bf16[64,256], index: 1, kind: input, shape index: {}]
  %s2 = inlined_call_operand.vmem [shape: f32[1,256], index: 2, kind: input, shape index: {}]
  %s3 = inlined_call_operand.vmem [shape: bf16[256,64], index: 3, kind: input, shape index: {}]
  %s4 = inlined_call_operand.vmem [shape: f32[1,64], index: 4, kind: input, shape index: {}]
  %s5 = inlined_call_operand.hbm [shape: f32[16,64], index: 5, kind: output, shape index: {}]
  %s6 = sld [smem:[#allocation0]]
  $region30: #{tpu_custom_call.1} parent=0
    _
  %s8 = ssub.s32 1, %s6
  %s9 = scalar_select 0, %s8, %s6
  $region1: #{tpu_custom_call.1} parent=0
    #allocation2 [shape = 'u8[8192]{0}', space=vmem, size = 0x2000, scoped, tag = 'output window, operand 0, single buffered']
    #allocation3 [shape = 's32[1]{0}', space=sflag, size = 0x4, scoped, tag = 'scoped memory for tpu_custom_call.1']
    %10 = vsyncpa [#allocation3], 0
    // Predicated region
    $region2: #{tpu_custom_call.1} parent=1 // pred_check
      _
    $region3: #{tpu_custom_call.1} parent=1 // pred_check_branch
      %12 = sbr.rel (0) target = $region5
    $region4: #{tpu_custom_call.1} parent=1 // pred_region
      _
    $region5: #{tpu_custom_call.1} parent=1 // pred_fallthru
      _
    // Predicated region
    $region6: #{tpu_custom_call.1} parent=1 // pred_check
      _
    $region7: #{tpu_custom_call.1} parent=1 // pred_check_branch
      %14 = sbr.rel (0) target = $region9
    $region8: #{tpu_custom_call.1} parent=1 // pred_region
      _
    $region9: #{tpu_custom_call.1} parent=1 // pred_fallthru
      _
    // Predicated region
    $region10: #{tpu_custom_call.1} parent=1 // pred_check
      _
    $region11: #{tpu_custom_call.1} parent=1 // pred_check_branch
      %16 = sbr.rel (0) target = $region13
    $region12: #{tpu_custom_call.1} parent=1 // pred_region
      _
    $region13: #{tpu_custom_call.1} parent=1 // pred_fallthru
      _
    // Predicated region
    $region14: #{tpu_custom_call.1} parent=1 // pred_check
      _
    $region15: #{tpu_custom_call.1} parent=1 // pred_check_branch
      %18 = sbr.rel (0) target = $region17
    $region16: #{tpu_custom_call.1} parent=1 // pred_region
      _
    $region17: #{tpu_custom_call.1} parent=1 // pred_fallthru
      _
    // Predicated region
    $region18: #{tpu_custom_call.1} parent=1 // pred_check
      _
    $region19: #{tpu_custom_call.1} parent=1 // pred_check_branch
      %20 = sbr.rel (0) target = $region21
    $region20: #{tpu_custom_call.1} parent=1 // pred_region
      _
    $region21: #{tpu_custom_call.1} parent=1 // pred_fallthru
      _
    %v22 = vld [vmem:[%s0] sm:$0xff]
    %v23 = vld [vmem:[%s0 + $0x8] sm:$0xff]
    %v24 = vpack.c.bf16 %v23, %v22
    %v25 = vld [vmem:[%s1] sm:$0xff]
    %v26 = vld [vmem:[%s1 + $0x8] sm:$0xff]
    %v27 = vld [vmem:[%s1 + $0x10] sm:$0xff]
    %v28 = vld [vmem:[%s1 + $0x18] sm:$0xff]
    %v29 = vld [vmem:[%s1 + $0x20] sm:$0xff]
    %v30 = vld [vmem:[%s1 + $0x28] sm:$0xff]
    %v31 = vld [vmem:[%s1 + $0x30] sm:$0xff]
    %v32 = vld [vmem:[%s1 + $0x38] sm:$0xff]
    %v33 = vld [vmem:[%s2] sm:$0x3]
    %v35 = vperm.slane %v33, 0
    %v36 = vperm.slane %v33, 1
    %v47 = vunpack.c.l.b16 %v25
    %v48 = vunpack.c.h.b16 %v25
    %v49 = vunpack.c.l.b16 %v26
    %v50 = vunpack.c.h.b16 %v26
    %v51 = vunpack.c.l.b16 %v27
    %v52 = vunpack.c.h.b16 %v27
    %v53 = vunpack.c.l.b16 %v28
    %v54 = vunpack.c.h.b16 %v28
    %v55 = vunpack.c.l.b16 %v29
    %v56 = vunpack.c.h.b16 %v29
    %v57 = vunpack.c.l.b16 %v30
    %v58 = vunpack.c.h.b16 %v30
    %v59 = vunpack.c.l.b16 %v31
    %v60 = vunpack.c.h.b16 %v31
    %v61 = vunpack.c.l.b16 %v32
    %v62 = vunpack.c.h.b16 %v32
    %v63 = vpack.c.b16 %v49, %v47
    %v64 = vpack.c.b16 %v50, %v48
    %v65 = vpack.c.b16 %v53, %v51
    %v66 = vpack.c.b16 %v54, %v52
    %v67 = vpack.c.b16 %v57, %v55
    %v68 = vpack.c.b16 %v58, %v56
    %v69 = vpack.c.b16 %v61, %v59
    %v70 = vpack.c.b16 %v62, %v60
    %vm79 = vcmask 523264
    %v81 = vsel %vm79, %v24, 0
    %83 = vmatpush.bf16.msra.mxu0 0
    %84 = vmatpush.bf16.msra.mxu0 0
    %85 = vmatpush.bf16.msra.mxu0 0
    %86 = vmatpush.bf16.msra.mxu0 0
    %87 = vmatpush.bf16.msra.mxu0 %v69
    %88 = vmatpush.bf16.msra.mxu0 %v67
    %89 = vmatpush.bf16.msra.mxu0 %v65
    %90 = vmatpush.bf16.msra.mxu0 %v63
    %91 = vmatmul.bf16.gmra.mxu0 %v81
    %v92 = vpop.f32.mrf.mxu0
    %v93 = vadd.f32 %v35, %v92
    %v94 = vpop.f32.mrf.mxu0
    %v95 = vadd.f32 %v35, %v94
    %96 = vdwg.mxu0
    %97 = vmatpush.bf16.msra.mxu0 0
    %98 = vmatpush.bf16.msra.mxu0 0
    %99 = vmatpush.bf16.msra.mxu0 0
    %100 = vmatpush.bf16.msra.mxu0 0
    %101 = vmatpush.bf16.msra.mxu0 %v70
    %102 = vmatpush.bf16.msra.mxu0 %v68
    %103 = vmatpush.bf16.msra.mxu0 %v66
    %104 = vmatpush.bf16.msra.mxu0 %v64
    %105 = vmatmul.bf16.gmra.mxu0 %v81
    %v106 = vpop.f32.mrf.mxu0
    %v107 = vadd.f32 %v36, %v106
    %v108 = vpop.f32.mrf.mxu0
    %v109 = vadd.f32 %v36, %v108
    %110 = vdwg.mxu0
    %v111 = vmax.f32 %v93, 0.0
    %v112 = vmax.f32 %v107, 0.0
    %v113 = vmax.f32 %v95, 0.0
    %v114 = vmax.f32 %v109, 0.0
    %v115 = vpack.c.bf16 %v113, %v111
    %v116 = vpack.c.bf16 %v114, %v112
    %v117 = vld [vmem:[%s3] sm:$0xf]
    %v118 = vld [vmem:[%s3 + $0x4] sm:$0xf]
    %v119 = vld [vmem:[%s3 + $0x8] sm:$0xf]
    %v120 = vld [vmem:[%s3 + $0xc] sm:$0xf]
    %v121 = vld [vmem:[%s3 + $0x10] sm:$0xf]
    %v122 = vld [vmem:[%s3 + $0x14] sm:$0xf]
    %v123 = vld [vmem:[%s3 + $0x18] sm:$0xf]
    %v124 = vld [vmem:[%s3 + $0x1c] sm:$0xf]
    %v125 = vld [vmem:[%s3 + $0x20] sm:$0xf]
    %v126 = vld [vmem:[%s3 + $0x24] sm:$0xf]
    %v127 = vld [vmem:[%s3 + $0x28] sm:$0xf]
    %v128 = vld [vmem:[%s3 + $0x2c] sm:$0xf]
    %v129 = vld [vmem:[%s3 + $0x30] sm:$0xf]
    %v130 = vld [vmem:[%s3 + $0x34] sm:$0xf]
    %v131 = vld [vmem:[%s3 + $0x38] sm:$0xf]
    %v132 = vld [vmem:[%s3 + $0x3c] sm:$0xf]
    %v133 = vld [vmem:[%s3 + $0x40] sm:$0xf]
    %v134 = vld [vmem:[%s3 + $0x44] sm:$0xf]
    %v135 = vld [vmem:[%s3 + $0x48] sm:$0xf]
    %v136 = vld [vmem:[%s3 + $0x4c] sm:$0xf]
    %v137 = vld [vmem:[%s3 + $0x50] sm:$0xf]
    %v138 = vld [vmem:[%s3 + $0x54] sm:$0xf]
    %v139 = vld [vmem:[%s3 + $0x58] sm:$0xf]
    %v140 = vld [vmem:[%s3 + $0x5c] sm:$0xf]
    %v141 = vld [vmem:[%s3 + $0x60] sm:$0xf]
    %v142 = vld [vmem:[%s3 + $0x64] sm:$0xf]
    %v143 = vld [vmem:[%s3 + $0x68] sm:$0xf]
    %v144 = vld [vmem:[%s3 + $0x6c] sm:$0xf]
    %v145 = vld [vmem:[%s3 + $0x70] sm:$0xf]
    %v146 = vld [vmem:[%s3 + $0x74] sm:$0xf]
    %v147 = vld [vmem:[%s3 + $0x78] sm:$0xf]
    %v148 = vld [vmem:[%s3 + $0x7c] sm:$0xf]
    %v149 = vld [vmem:[%s4] sm:$0x1]
    %v151 = vperm.slane %v149, 0
    %v185 = vunpack.c.l.b16 %v117
    %v186 = vunpack.c.l.b16 %v118
    %v187 = vunpack.c.l.b16 %v119
    %v188 = vunpack.c.l.b16 %v120
    %v189 = vunpack.c.l.b16 %v121
    %v190 = vunpack.c.l.b16 %v122
    %v191 = vunpack.c.l.b16 %v123
    %v192 = vunpack.c.l.b16 %v124
    %v193 = vunpack.c.l.b16 %v125
    %v194 = vunpack.c.l.b16 %v126
    %v195 = vunpack.c.l.b16 %v127
    %v196 = vunpack.c.l.b16 %v128
    %v197 = vunpack.c.l.b16 %v129
    %v198 = vunpack.c.l.b16 %v130
    %v199 = vunpack.c.l.b16 %v131
    %v200 = vunpack.c.l.b16 %v132
    %v201 = vunpack.c.l.b16 %v133
    %v202 = vunpack.c.l.b16 %v134
    %v203 = vunpack.c.l.b16 %v135
    %v204 = vunpack.c.l.b16 %v136
    %v205 = vunpack.c.l.b16 %v137
    %v206 = vunpack.c.l.b16 %v138
    %v207 = vunpack.c.l.b16 %v139
    %v208 = vunpack.c.l.b16 %v140
    %v209 = vunpack.c.l.b16 %v141
    %v210 = vunpack.c.l.b16 %v142
    %v211 = vunpack.c.l.b16 %v143
    %v212 = vunpack.c.l.b16 %v144
    %v213 = vunpack.c.l.b16 %v145
    %v214 = vunpack.c.l.b16 %v146
    %v215 = vunpack.c.l.b16 %v147
    %v216 = vunpack.c.l.b16 %v148
    %v217 = vpack.c.b16 %v186, %v185
    %v218 = vpack.c.b16 %v188, %v187
    %v219 = vpack.c.b16 %v190, %v189
    %v220 = vpack.c.b16 %v192, %v191
    %v221 = vpack.c.b16 %v194, %v193
    %v222 = vpack.c.b16 %v196, %v195
    %v223 = vpack.c.b16 %v198, %v197
    %v224 = vpack.c.b16 %v200, %v199
    %v225 = vpack.c.b16 %v202, %v201
    %v226 = vpack.c.b16 %v204, %v203
    %v227 = vpack.c.b16 %v206, %v205
    %v228 = vpack.c.b16 %v208, %v207
    %v229 = vpack.c.b16 %v210, %v209
    %v230 = vpack.c.b16 %v212, %v211
    %v231 = vpack.c.b16 %v214, %v213
    %v232 = vpack.c.b16 %v216, %v215
    %249 = vmatpush.bf16.msra.mxu0 %v224
    %250 = vmatpush.bf16.msra.mxu0 %v223
    %251 = vmatpush.bf16.msra.mxu0 %v222
    %252 = vmatpush.bf16.msra.mxu0 %v221
    %253 = vmatpush.bf16.msra.mxu0 %v220
    %254 = vmatpush.bf16.msra.mxu0 %v219
    %255 = vmatpush.bf16.msra.mxu0 %v218
    %256 = vmatpush.bf16.msra.mxu0 %v217
    %257 = vmatmul.bf16.gmra.mxu0 %v115
    %v258 = vpop.f32.mrf.mxu0
    %v259 = vadd.f32 %v151, %v258
    %v260 = vpop.f32.mrf.mxu0
    %v261 = vadd.f32 %v151, %v260
    %262 = vdwg.mxu0
    %263 = vmatpush.bf16.msra.mxu0 %v232
    %264 = vmatpush.bf16.msra.mxu0 %v231
    %265 = vmatpush.bf16.msra.mxu0 %v230
    %266 = vmatpush.bf16.msra.mxu0 %v229
    %267 = vmatpush.bf16.msra.mxu0 %v228
    %268 = vmatpush.bf16.msra.mxu0 %v227
    %269 = vmatpush.bf16.msra.mxu0 %v226
    %270 = vmatpush.bf16.msra.mxu0 %v225
    %271 = vmatmul.bf16.gmra.mxu0 %v116
    %v272 = vpop.f32.mrf.mxu0
    %v273 = vadd.f32 %v259, %v272
    %v274 = vpop.f32.mrf.mxu0
    %v275 = vadd.f32 %v261, %v274
    %276 = vdwg.mxu0
    %277 = vst.msk [vmem:[#allocation2] sm:$0xff] %vm79, %v273
    %278 = vst.msk [vmem:[#allocation2 + $0x8] sm:$0xff] %vm79, %v275
    // Predicated region
    $region22: #{tpu_custom_call.1} parent=1 // pred_check
      _
    $region23: #{tpu_custom_call.1} parent=1 // pred_check_branch
      %280 = sbr.rel (0) target = $region25
    $region24: #{tpu_custom_call.1} parent=1 // pred_region
      %282 = vsyncadd [#allocation3], 0
      %s283 = sshll.u32 [#allocation2], 4
      %s284 = int_to_ptr.vmem [resolvable:$true] %s283
      %s285 = sshll.u32 %s5, 4
      %s286 = int_to_ptr.hbm [resolvable:$true] %s285
      %291 = dma.vmem_to_hbm [thread:$0]  %s284, 256, %s286, [#allocation3], 128, 128, 8
    $region25: #{tpu_custom_call.1} parent=1 // pred_fallthru
      _
    // Predicated region
    $region26: #{tpu_custom_call.1} parent=1 // pred_check
      _
    $region27: #{tpu_custom_call.1} parent=1 // pred_check_branch
      %293 = sbr.rel (0) target = $region29
    $region28: #{tpu_custom_call.1} parent=1 // pred_region
      %295 = dma.done [#allocation3], 256
    $region29: #{tpu_custom_call.1} parent=1 // pred_fallthru
      _
    %296 = vsyncpa [#allocation3], 1

</llo_original>
